<compile_context>
chip_gen: v7x
topology: tpu7x:2x2x1
jax: 0.10.0
libtpu: 0.0.40
codegen_flags: <defaults>
</compile_context>

<pallas_src>
import functools

import jax
import jax.numpy as jnp
from jax import lax
from jax.experimental import pallas as pl
from jax.experimental.pallas import tpu as pltpu


# ----------------------------------------------------------------------------
# Synthetic "model" description (mirrors the nn.Conv2d attributes we check).
# ----------------------------------------------------------------------------
class ConvSpec:
    def __init__(self, in_channels, out_channels, kernel_size, padding, groups):
        self.in_channels = in_channels
        self.out_channels = out_channels
        self.kernel_size = kernel_size
        self.padding = padding
        self.groups = groups


def has_depthwise_convolutions(conv_specs) -> bool:
    # Mirrors: isinstance(m, nn.Conv2d) and m.groups == m.out_channels
    for spec in conv_specs:
        if spec.groups == spec.out_channels:
            return True
    return False


# ----------------------------------------------------------------------------
# Pallas kernel: fused 3x3 "same" conv + bias + ReLU (single K=37 MXU push).
# ----------------------------------------------------------------------------
def _conv3x3_bias_relu_kernel(x_ref, w_ref, o_ref, *, taps, height, width):
    # x_ref: (nb, C, P)     lane-dense input slab (P = H*W on lanes)
    # w_ref: (OC, 9*C + 1)  tap-major weights, bias folded in as last column
    # o_ref: (nb, OC, P)    lane-dense, NCHW-ordered output block
    nb, c, p = x_ref.shape

    # Border-validity masks along the flattened spatial (lane) axis, built
    # in-kernel.  h = flat // W, w = flat % W.
    flat = lax.broadcasted_iota(jnp.int32, (1, p), 1)
    col = flat % width
    tap_masks = []
    for dh, dw in taps:
        if dh == 0 and dw == 0:
            tap_masks.append(None)          # center tap needs no mask
            continue
        conds = []
        if dw == -1:
            conds.append(col >= 1)
        elif dw == 1:
            conds.append(col <= width - 2)
        if dh == -1:
            conds.append(flat >= width)
        elif dh == 1:
            conds.append(flat < (height - 1) * width)
        m = conds[0]
        for cnd in conds[1:]:
            m = jnp.logical_and(m, cnd)
        tap_masks.append(m)

    w_ext = w_ref[...]                                     # (OC, 9*C + 1)
    ones_row = jnp.ones((1, p), dtype=x_ref.dtype)         # bias row (hoisted)

    for i in range(nb):                                    # static, nb is tiny
        x = x_ref[i]                                       # (C, P)
        rows = []
        for t, (dh, dw) in enumerate(taps):
            s = dh * width + dw                            # flat-index shift
            xs = x if s == 0 else pltpu.roll(x, shift=(-s) % p, axis=1)
            if tap_masks[t] is not None:
                xs = jnp.where(tap_masks[t], xs, jnp.zeros_like(xs))
            rows.append(xs)
        rows.append(ones_row)                              # bias contribution
        stacked = jnp.concatenate(rows, axis=0)            # (9*C + 1, P)
        acc = lax.dot_general(                             # one fused matmul
            w_ext, stacked, (((1,), (0,)), ((), ())),
            preferred_element_type=jnp.float32)            # (OC, P)
        o_ref[i] = jnp.maximum(acc, 0.0).astype(o_ref.dtype)


def conv2d3x3_relu_pallas(x, weight, bias):
    """Fused 3x3 stride-1 'same' conv + bias + ReLU.

    x: [N, C, H, W] (NCHW, like PyTorch), weight: [OC, C, 3, 3], bias: [OC].
    Returns [N, OC, H, W].
    """
    n, c, h, w = x.shape
    oc, c_w, kh, kw = weight.shape
    assert c == c_w and (kh, kw) == (3, 3)
    p = h * w

    taps = tuple((dh, dw) for dh in (-1, 0, 1) for dw in (-1, 0, 1))

    # Lane-dense slab: free reshape of the NCHW tensor (no transpose, no pad).
    x_slab = x.reshape(n, c, p).astype(jnp.float32)

    # Tap-major (OC, 9*C) weight matrix; bias folded in as an extra column.
    w_mat = jnp.transpose(weight, (2, 3, 1, 0)).reshape(kh * kw * c, oc).T
    w_ext = jnp.concatenate(
        [w_mat, bias.reshape(oc, 1)], axis=1).astype(jnp.float32)  # (OC, 9C+1)
    kdim = w_ext.shape[1]

    # Few fat grid steps: 2 parallel blocks when possible (both v7x TCs busy,
    # minimal per-step overhead on single-TC v5e/v6e), else 1 sample / step.
    if n >= 2 and n % 2 == 0:
        blocks, nb = 2, n // 2
    else:
        blocks, nb = n, 1

    kernel = functools.partial(_conv3x3_bias_relu_kernel,
                               taps=taps, height=h, width=w)

    flops = 2 * n * oc * p * kdim
    bytes_accessed = 4 * (x_slab.size + w_ext.size + n * oc * p)

    out_flat = pl.pallas_call(
        kernel,
        out_shape=jax.ShapeDtypeStruct((n, oc, p), x.dtype),
        grid_spec=pltpu.PrefetchScalarGridSpec(
            num_scalar_prefetch=0,
            grid=(blocks,),
            in_specs=[
                pl.BlockSpec((nb, c, p), lambda i: (i, 0, 0)),   # input slab
                pl.BlockSpec((oc, kdim), lambda i: (0, 0)),      # weights+bias
            ],
            out_specs=pl.BlockSpec((nb, oc, p), lambda i: (i, 0, 0)),
        ),
        compiler_params=pltpu.CompilerParams(
            dimension_semantics=("parallel",)),
        cost_estimate=pl.CostEstimate(
            flops=flops, transcendentals=0, bytes_accessed=bytes_accessed),
    )(x_slab, w_ext)

    # (N, OC, H*W) is already NCHW-ordered -> free reshape, no transpose.
    return out_flat.reshape(n, oc, h, w)


# ----------------------------------------------------------------------------
# NoDepthwiseCheckWrapper equivalent.
# ----------------------------------------------------------------------------
class NoDepthwiseCheckWrapper:
    def __init__(self, conv_specs, params):
        self.conv_specs = conv_specs
        self.params = params  # dict: {"weight": ..., "bias": ...}

    def forward(self, x):
        # TODO(synk): in PyTorch this walks self.modules(); here the wrapped
        # model's structure is described by ConvSpec metadata (host-side only).
        if has_depthwise_convolutions(self.conv_specs):
            raise RuntimeError("Depthwise separable convolution detected!")
        # The wrapped model: Conv2d(4, 8, 3, pad=1, groups=1) + ReLU.
        return conv2d3x3_relu_pallas(
            x, self.params["weight"], self.params["bias"])

    __call__ = forward


if __name__ == "__main__":
    key = jax.random.PRNGKey(0)
    kx, kw_, kb = jax.random.split(key, 3)

    N, C, H, W = 2, 4, 16, 16
    OC, KH, KW = 8, 3, 3

    x = jax.random.normal(kx, (N, C, H, W), dtype=jnp.float32)
    weight = jax.random.normal(kw_, (OC, C, KH, KW), dtype=jnp.float32) * 0.1
    bias = jax.random.normal(kb, (OC,), dtype=jnp.float32) * 0.1

    model = NoDepthwiseCheckWrapper(
        conv_specs=[ConvSpec(C, OC, (KH, KW), padding=1, groups=1)],
        params={"weight": weight, "bias": bias},
    )

    out = model(x)
    jax.block_until_ready(out)

    # Cross-check against a plain-JAX reference conv (ReLU included).
    ref = jax.lax.conv_general_dilated(
        x, weight, window_strides=(1, 1), padding=((1, 1), (1, 1)),
        dimension_numbers=("NCHW", "OIHW", "NCHW"))
    ref = jnp.maximum(ref + bias.reshape(1, OC, 1, 1), 0.0)
    assert out.shape == (N, OC, H, W)
    assert jnp.allclose(out, ref, atol=1e-3, rtol=1e-3)

    print("KERNEL_OK")
</pallas_src>

<mosaic_0001>
module attributes {stable_mosaic.version = 11 : i64} {
  func.func @_conv3x3_bias_relu_kernel(%arg0: i32, %arg1: memref<1x4x256xf32, #tpu.memory_space<vmem>>, %arg2: memref<8x37xf32, #tpu.memory_space<vmem>>, %arg3: memref<1x8x256xf32, #tpu.memory_space<vmem>>) attributes {dimension_semantics = [#tpu.dimension_semantics<parallel>], iteration_bounds = array<i64: 2>, scalar_prefetch = 0 : i64, scratch_operands = 0 : i64, tpu.core_type = #tpu.core_type<tc>, window_params = [{transform_indices = @transform_0, window_bounds = array<i64: 1, 4, 256>}, {pipeline_mode = #tpu.pipeline_mode<synchronous>, transform_indices = @transform_1, window_bounds = array<i64: 8, 37>}, {transform_indices = @transform_2, window_bounds = array<i64: 1, 8, 256>}]} {
    %0 = tpu.iota {dimensions = array<i32: 1>} : vector<1x256xi32>
    %c16_i32 = arith.constant 16 : i32
    %c0_i32 = arith.constant 0 : i32
    %1 = arith.cmpi eq, %c16_i32, %c0_i32 : i32
    %c1_i32 = arith.constant 1 : i32
    %2 = arith.select %1, %c1_i32, %c16_i32 : i32
    %3 = vector.broadcast %2 : i32 to vector<1x256xi32>
    %4 = arith.remsi %0, %3 : vector<1x256xi32>
    %c0_i32_0 = arith.constant 0 : i32
    %5 = vector.broadcast %c0_i32_0 : i32 to vector<1x256xi32>
    %6 = arith.cmpi ne, %4, %5 : vector<1x256xi32>
    %c0_i32_1 = arith.constant 0 : i32
    %7 = vector.broadcast %c0_i32_1 : i32 to vector<1x256xi32>
    %8 = arith.cmpi slt, %4, %7 : vector<1x256xi32>
    %c0_i32_2 = arith.constant 0 : i32
    %9 = arith.cmpi slt, %2, %c0_i32_2 : i32
    %10 = vector.broadcast %9 : i1 to vector<1x256xi1>
    %11 = vector.broadcast %10 : vector<1x256xi1> to vector<1x256xi1>
    %12 = arith.xori %8, %11 : vector<1x256xi1>
    %13 = arith.andi %12, %6 : vector<1x256xi1>
    %14 = vector.broadcast %2 : i32 to vector<1x256xi32>
    %15 = arith.addi %4, %14 : vector<1x256xi32>
    %16 = arith.select %13, %15, %4 : vector<1x256xi1>, vector<1x256xi32>
    %c1_i32_3 = arith.constant 1 : i32
    %17 = vector.broadcast %c1_i32_3 : i32 to vector<1x256xi32>
    %18 = arith.cmpi sge, %16, %17 : vector<1x256xi32>
    %c16_i32_4 = arith.constant 16 : i32
    %19 = vector.broadcast %c16_i32_4 : i32 to vector<1x256xi32>
    %20 = arith.cmpi sge, %0, %19 : vector<1x256xi32>
    %21 = arith.andi %18, %20 : vector<1x256xi1>
    %c16_i32_5 = arith.constant 16 : i32
    %22 = vector.broadcast %c16_i32_5 : i32 to vector<1x256xi32>
    %23 = arith.cmpi sge, %0, %22 : vector<1x256xi32>
    %c14_i32 = arith.constant 14 : i32
    %24 = vector.broadcast %c14_i32 : i32 to vector<1x256xi32>
    %25 = arith.cmpi sle, %16, %24 : vector<1x256xi32>
    %c16_i32_6 = arith.constant 16 : i32
    %26 = vector.broadcast %c16_i32_6 : i32 to vector<1x256xi32>
    %27 = arith.cmpi sge, %0, %26 : vector<1x256xi32>
    %28 = arith.andi %25, %27 : vector<1x256xi1>
    %c1_i32_7 = arith.constant 1 : i32
    %29 = vector.broadcast %c1_i32_7 : i32 to vector<1x256xi32>
    %30 = arith.cmpi sge, %16, %29 : vector<1x256xi32>
    %c14_i32_8 = arith.constant 14 : i32
    %31 = vector.broadcast %c14_i32_8 : i32 to vector<1x256xi32>
    %32 = arith.cmpi sle, %16, %31 : vector<1x256xi32>
    %c1_i32_9 = arith.constant 1 : i32
    %33 = vector.broadcast %c1_i32_9 : i32 to vector<1x256xi32>
    %34 = arith.cmpi sge, %16, %33 : vector<1x256xi32>
    %c240_i32 = arith.constant 240 : i32
    %35 = vector.broadcast %c240_i32 : i32 to vector<1x256xi32>
    %36 = arith.cmpi slt, %0, %35 : vector<1x256xi32>
    %37 = arith.andi %34, %36 : vector<1x256xi1>
    %c240_i32_10 = arith.constant 240 : i32
    %38 = vector.broadcast %c240_i32_10 : i32 to vector<1x256xi32>
    %39 = arith.cmpi slt, %0, %38 : vector<1x256xi32>
    %c14_i32_11 = arith.constant 14 : i32
    %40 = vector.broadcast %c14_i32_11 : i32 to vector<1x256xi32>
    %41 = arith.cmpi sle, %16, %40 : vector<1x256xi32>
    %c240_i32_12 = arith.constant 240 : i32
    %42 = vector.broadcast %c240_i32_12 : i32 to vector<1x256xi32>
    %43 = arith.cmpi slt, %0, %42 : vector<1x256xi32>
    %44 = arith.andi %41, %43 : vector<1x256xi1>
    %c0 = arith.constant 0 : index
    %c0_13 = arith.constant 0 : index
    %45 = vector.load %arg2[%c0, %c0_13] : memref<8x37xf32, #tpu.memory_space<vmem>>, vector<8x37xf32>
    %cst = arith.constant 1.000000e+00 : f32
    %46 = vector.broadcast %cst : f32 to vector<1x256xf32>
    %c0_14 = arith.constant 0 : index
    %c0_15 = arith.constant 0 : index
    %c0_16 = arith.constant 0 : index
    %47 = vector.load %arg1[%c0_14, %c0_15, %c0_16] : memref<1x4x256xf32, #tpu.memory_space<vmem>>, vector<1x4x256xf32>
    %48 = vector.shape_cast %47 : vector<1x4x256xf32> to vector<4x256xf32>
    %c17_i32 = arith.constant 17 : i32
    %49 = tpu.dynamic_rotate %48 by %c17_i32 dim 1 : vector<4x256xf32>, i32 -> vector<4x256xf32>
    %cst_17 = arith.constant 0.000000e+00 : f32
    %50 = vector.broadcast %cst_17 : f32 to vector<4x256xf32>
    %51 = vector.shape_cast %21 : vector<1x256xi1> to vector<1x256xi1>
    %52 = vector.broadcast %51 : vector<1x256xi1> to vector<4x256xi1>
    %53 = arith.select %52, %49, %50 : vector<4x256xi1>, vector<4x256xf32>
    %c16_i32_18 = arith.constant 16 : i32
    %54 = tpu.dynamic_rotate %48 by %c16_i32_18 dim 1 : vector<4x256xf32>, i32 -> vector<4x256xf32>
    %cst_19 = arith.constant 0.000000e+00 : f32
    %55 = vector.broadcast %cst_19 : f32 to vector<4x256xf32>
    %56 = vector.shape_cast %23 : vector<1x256xi1> to vector<1x256xi1>
    %57 = vector.broadcast %56 : vector<1x256xi1> to vector<4x256xi1>
    %58 = arith.select %57, %54, %55 : vector<4x256xi1>, vector<4x256xf32>
    %c15_i32 = arith.constant 15 : i32
    %59 = tpu.dynamic_rotate %48 by %c15_i32 dim 1 : vector<4x256xf32>, i32 -> vector<4x256xf32>
    %cst_20 = arith.constant 0.000000e+00 : f32
    %60 = vector.broadcast %cst_20 : f32 to vector<4x256xf32>
    %61 = vector.shape_cast %28 : vector<1x256xi1> to vector<1x256xi1>
    %62 = vector.broadcast %61 : vector<1x256xi1> to vector<4x256xi1>
    %63 = arith.select %62, %59, %60 : vector<4x256xi1>, vector<4x256xf32>
    %c1_i32_21 = arith.constant 1 : i32
    %64 = tpu.dynamic_rotate %48 by %c1_i32_21 dim 1 : vector<4x256xf32>, i32 -> vector<4x256xf32>
    %cst_22 = arith.constant 0.000000e+00 : f32
    %65 = vector.broadcast %cst_22 : f32 to vector<4x256xf32>
    %66 = vector.shape_cast %30 : vector<1x256xi1> to vector<1x256xi1>
    %67 = vector.broadcast %66 : vector<1x256xi1> to vector<4x256xi1>
    %68 = arith.select %67, %64, %65 : vector<4x256xi1>, vector<4x256xf32>
    %c255_i32 = arith.constant 255 : i32
    %69 = tpu.dynamic_rotate %48 by %c255_i32 dim 1 : vector<4x256xf32>, i32 -> vector<4x256xf32>
    %cst_23 = arith.constant 0.000000e+00 : f32
    %70 = vector.broadcast %cst_23 : f32 to vector<4x256xf32>
    %71 = vector.shape_cast %32 : vector<1x256xi1> to vector<1x256xi1>
    %72 = vector.broadcast %71 : vector<1x256xi1> to vector<4x256xi1>
    %73 = arith.select %72, %69, %70 : vector<4x256xi1>, vector<4x256xf32>
    %c241_i32 = arith.constant 241 : i32
    %74 = tpu.dynamic_rotate %48 by %c241_i32 dim 1 : vector<4x256xf32>, i32 -> vector<4x256xf32>
    %cst_24 = arith.constant 0.000000e+00 : f32
    %75 = vector.broadcast %cst_24 : f32 to vector<4x256xf32>
    %76 = vector.shape_cast %37 : vector<1x256xi1> to vector<1x256xi1>
    %77 = vector.broadcast %76 : vector<1x256xi1> to vector<4x256xi1>
    %78 = arith.select %77, %74, %75 : vector<4x256xi1>, vector<4x256xf32>
    %c240_i32_25 = arith.constant 240 : i32
    %79 = tpu.dynamic_rotate %48 by %c240_i32_25 dim 1 : vector<4x256xf32>, i32 -> vector<4x256xf32>
    %cst_26 = arith.constant 0.000000e+00 : f32
    %80 = vector.broadcast %cst_26 : f32 to vector<4x256xf32>
    %81 = vector.shape_cast %39 : vector<1x256xi1> to vector<1x256xi1>
    %82 = vector.broadcast %81 : vector<1x256xi1> to vector<4x256xi1>
    %83 = arith.select %82, %79, %80 : vector<4x256xi1>, vector<4x256xf32>
    %c239_i32 = arith.constant 239 : i32
    %84 = tpu.dynamic_rotate %48 by %c239_i32 dim 1 : vector<4x256xf32>, i32 -> vector<4x256xf32>
    %cst_27 = arith.constant 0.000000e+00 : f32
    %85 = vector.broadcast %cst_27 : f32 to vector<4x256xf32>
    %86 = vector.shape_cast %44 : vector<1x256xi1> to vector<1x256xi1>
    %87 = vector.broadcast %86 : vector<1x256xi1> to vector<4x256xi1>
    %88 = arith.select %87, %84, %85 : vector<4x256xi1>, vector<4x256xf32>
    %89 = tpu.concatenate %53, %58, %63, %68, %48, %73, %78, %83, %88, %46 in 0 : vector<4x256xf32>, vector<4x256xf32>, vector<4x256xf32>, vector<4x256xf32>, vector<4x256xf32>, vector<4x256xf32>, vector<4x256xf32>, vector<4x256xf32>, vector<4x256xf32>, vector<1x256xf32> -> vector<37x256xf32>
    %cst_28 = arith.constant dense<0.000000e+00> : vector<8x256xf32>
    %90 = tpu.matmul %45, %89, %cst_28 {dimension_numbers = #tpu.dot_dimension_numbers<[1], [0], [0], [1], [0, 0, 1, 1], [], []>} : vector<8x37xf32>, vector<37x256xf32>, vector<8x256xf32> -> vector<8x256xf32>
    %cst_29 = arith.constant 0.000000e+00 : f32
    %91 = vector.broadcast %cst_29 : f32 to vector<8x256xf32>
    %92 = arith.maximumf %90, %91 : vector<8x256xf32>
    %c0_30 = arith.constant 0 : index
    %c0_31 = arith.constant 0 : index
    %c0_32 = arith.constant 0 : index
    %93 = vector.load %arg3[%c0_30, %c0_31, %c0_32] : memref<1x8x256xf32, #tpu.memory_space<vmem>>, vector<1x8x256xf32>
    %94 = vector.shape_cast %93 : vector<1x8x256xf32> to vector<8x256xf32>
    %95 = vector.shape_cast %92 : vector<8x256xf32> to vector<1x8x256xf32>
    tpu.vector_store %arg3[%c0_30, %c0_31, %c0_32], %95 {strides = array<i32>} : memref<1x8x256xf32, #tpu.memory_space<vmem>>, vector<1x8x256xf32>,
    return
  }
  func.func @transform_0(%arg0: i32) -> (i32, i32, i32) {
    %c0_i32 = arith.constant 0 : i32
    %c0_i32_0 = arith.constant 0 : i32
    %c0_i32_1 = arith.constant 0 : i32
    return %arg0, %c0_i32, %c0_i32_0 : i32, i32, i32
  }
  func.func @transform_1(%arg0: i32) -> (i32, i32) {
    %c0_i32 = arith.constant 0 : i32
    %c0_i32_0 = arith.constant 0 : i32
    %c0_i32_1 = arith.constant 0 : i32
    return %c0_i32, %c0_i32_0 : i32, i32
  }
  func.func @transform_2(%arg0: i32) -> (i32, i32, i32) {
    %c0_i32 = arith.constant 0 : i32
    %c0_i32_0 = arith.constant 0 : i32
    %c0_i32_1 = arith.constant 0 : i32
    return %arg0, %c0_i32, %c0_i32_0 : i32, i32, i32
  }
}

</mosaic_0001>

<llo_original>
// kernel: tpu_custom_call.1
$region0: #{tpu_custom_call.1}
  #allocation0 [shape = 'u32[]', space=smem, size = 0x4, offset = 0x4, fixed_abs, tag = 'smem constant byte address 0x4 - core index']
  #allocation1 [shape = 'u32[144,128]{1,0:T(1,128)}', space=vmem, size = 0x12000, scoped, tag = 'internal scratch']
  %s0 = inlined_call_operand.hbm [shape: f32[2,4,256], index: 0, kind: input, shape index: {}]
  %s1 = inlined_call_operand.hbm [shape: f32[8,37], index: 1, kind: input, shape index: {}]
  %s2 = inlined_call_operand.hbm [shape: f32[2,8,256], index: 2, kind: output, shape index: {}]
  %s3 = sld [smem:[#allocation0]]
  $region49: #{tpu_custom_call.1} parent=0
    _
  %s5 = ssub.s32 1, %s3
  %s6 = scalar_select 0, %s5, %s3
  $region1: #{tpu_custom_call.1} parent=0
    #allocation2 [shape = 'u8[8192]{0}', space=vmem, size = 0x2000, scoped, tag = 'input window, operand 0']
    #allocation3 [shape = 's32[2]{0}', space=sflag, size = 0x8, scoped, tag = 'scoped memory for tpu_custom_call.1']
    #allocation4 [shape = 's32[2]{0}', space=sflag, size = 0x8, scoped, tag = 'scoped memory for tpu_custom_call.1']
    #allocation5 [shape = 'u8[4096]{0}', space=vmem, size = 0x1000, scoped, tag = 'input window, operand 1, single buffered']
    #allocation6 [shape = 's32[1]{0}', space=sflag, size = 0x4, scoped, tag = 'scoped memory for tpu_custom_call.1']
    #allocation7 [shape = 'u8[16384]{0}', space=vmem, size = 0x4000, scoped, tag = 'output window, operand 0']
    %7 = vsyncpa [#allocation3], 0
    %s8 = scalar_lea.sflag [#allocation3], 1
    %9 = vsyncpa %s8, 0
    %10 = vsyncpa [#allocation6], 0
    %11 = vsyncpa [#allocation4], 0
    %s12 = scalar_lea.sflag [#allocation4], 1
    %13 = vsyncpa %s12, 0
    loop: start=0, step=1, limit=4
    $region2: #{tpu_custom_call.1} parent=1 // loop_pre_header
      _
    $region3: #{tpu_custom_call.1} parent=1 // loop_header
      %s15 = sphi 0, %s19
      %p16 = scmp.ge.s32.totalorder %s15, 4
      %s25 = sphi 0, %s27
      %s28 = sphi 0, %s25
      %s29 = sphi 0, %s28
      %s45 = sphi 0, %s29
      %s49 = sphi 0, %s49
      %s51 = sphi 0, %s49
      %s52 = sphi 0, %s51
      %s66 = sphi 0, %s52
      %s72 = sphi 0, %s74
      %s75 = sphi 0, %s72
      %s76 = sphi 0, %s75
      %s92 = sphi 0, %s76
    $region4: #{tpu_custom_call.1} parent=1 // loop_header_branch
      %18 = sbr.rel (%p16) target = $region8
    $region5: #{tpu_custom_call.1} parent=1 // loop_body
      %s20 = ssub.s32 %s15, 1
      %s21 = ssub.s32 %s15, 2
      %s22 = sadd.s32 %s15, 1
      %s23 = ssub.s32 %s15, %s22
      %p24 = scmp.eq.s32.totalorder %s23, 0
      %s26 = sadd.s32 %s25, 1
      %s27 = scalar_select %p24, %s25, %s26
      %p30 = pneg %p24
      %p31 = scmp.eq.s32.totalorder %s15, 1
      %p32 = por %p30, %p31
      %p33 = scmp.ne.s32.totalorder %s25, %s28
      %p34 = scmp.eq.s32.totalorder %s15, 0
      %p35 = por %p33, %p34
      %p36 = scmp.ne.s32.totalorder %s25, %s28
      %p37 = scmp.eq.s32.totalorder %s20, 1
      %p38 = por %p36, %p37
      %p39 = scmp.ne.s32.totalorder %s28, %s29
      %p40 = scmp.eq.s32.totalorder %s20, 0
      %p41 = por %p39, %p40
      %p42 = scmp.ne.s32.totalorder %s28, %s29
      %p43 = scmp.eq.s32.totalorder %s21, 1
      %p44 = por %p42, %p43
      %p46 = scmp.ne.s32.totalorder %s29, %s45
      %p47 = scmp.eq.s32.totalorder %s21, 0
      %p48 = por %p46, %p47
      %s50 = sadd.s32 %s49, 1
      %p53 = scmp.eq.s32.totalorder %s15, 1
      %p54 = scmp.ne.s32.totalorder %s49, %s51
      %p55 = scmp.eq.s32.totalorder %s15, 0
      %p56 = por %p54, %p55
      %p57 = scmp.ne.s32.totalorder %s49, %s51
      %p58 = scmp.eq.s32.totalorder %s20, 1
      %p59 = por %p57, %p58
      %p60 = scmp.ne.s32.totalorder %s51, %s52
      %p61 = scmp.eq.s32.totalorder %s20, 0
      %p62 = por %p60, %p61
      %p63 = scmp.ne.s32.totalorder %s51, %s52
      %p64 = scmp.eq.s32.totalorder %s21, 1
      %p65 = por %p63, %p64
      %p67 = scmp.ne.s32.totalorder %s52, %s66
      %p68 = scmp.eq.s32.totalorder %s21, 0
      %p69 = por %p67, %p68
      %s70 = ssub.s32 %s15, %s22
      %p71 = scmp.eq.s32.totalorder %s70, 0
      %s73 = sadd.s32 %s72, 1
      %s74 = scalar_select %p71, %s72, %s73
      %p77 = pneg %p71
      %p78 = scmp.eq.s32.totalorder %s15, 1
      %p79 = por %p77, %p78
      %p80 = scmp.ne.s32.totalorder %s72, %s75
      %p81 = scmp.eq.s32.totalorder %s15, 0
      %p82 = por %p80, %p81
      %p83 = scmp.ne.s32.totalorder %s72, %s75
      %p84 = scmp.eq.s32.totalorder %s20, 1
      %p85 = por %p83, %p84
      %p86 = scmp.ne.s32.totalorder %s75, %s76
      %p87 = scmp.eq.s32.totalorder %s20, 0
      %p88 = por %p86, %p87
      %p89 = scmp.ne.s32.totalorder %s75, %s76
      %p90 = scmp.eq.s32.totalorder %s21, 1
      %p91 = por %p89, %p90
      %p93 = scmp.ne.s32.totalorder %s76, %s92
      %p94 = scmp.eq.s32.totalorder %s21, 0
      %p95 = por %p93, %p94
      %p96 = scmp.le.s32.totalorder 1, %s15
      %p97 = scmp.lt.s32.totalorder %s15, 3
      %p98 = pnand %p96, %p97
      %p99 = pneg %p98
      // Predicated region
      $region9: #{tpu_custom_call.1} parent=5 // pred_check
        _
      $region10: #{tpu_custom_call.1} parent=5 // pred_check_branch
        %101 = sbr.rel (%p98) target = $region12
      $region11: #{tpu_custom_call.1} parent=5 // pred_region
        %s102 = ssub.s32 %s15, 1
        // Predicated region
        $region13: #{tpu_custom_call.1} parent=11 // pred_check
          %p103 = pneg %p62
        $region14: #{tpu_custom_call.1} parent=11 // pred_check_branch
          %105 = sbr.rel (%p103) target = $region16
        $region15: #{tpu_custom_call.1} parent=11 // pred_region
          %s107 = ssub.s32 128, 128
          %108 = vsyncadd [#allocation6], %s107
          %s110 = sshll.u32 [#allocation5], 4
          %s111 = int_to_ptr.vmem [resolvable:$true] %s110
          %113 = dma.hbm_to_vmem [thread:$0]  %s1, 128, %s111, [#allocation6]
        $region16: #{tpu_custom_call.1} parent=11 // pred_fallthru
          _
      $region12: #{tpu_custom_call.1} parent=5 // pred_fallthru
        _
      %p114 = scmp.lt.s32.totalorder %s15, 2
      // Predicated region
      $region17: #{tpu_custom_call.1} parent=5 // pred_check
        %p115 = pneg %p114
      $region18: #{tpu_custom_call.1} parent=5 // pred_check_branch
        %117 = sbr.rel (%p115) target = $region20
      $region19: #{tpu_custom_call.1} parent=5 // pred_region
        // Predicated region
        $region21: #{tpu_custom_call.1} parent=19 // pred_check
          %p118 = pneg %p35
        $region22: #{tpu_custom_call.1} parent=19 // pred_check_branch
          %120 = sbr.rel (%p118) target = $region24
        $region23: #{tpu_custom_call.1} parent=19 // pred_region
          %s121 = sand.u32 %s25, 1
          %s122 = scalar_lea.sflag [#allocation3], %s121
          %s123 = sand.u32 %s25, 1
          %s124 = smul.addr %s123, 8
          %s125 = scalar_lea.vmem [#allocation2], %s124
          %s127 = ssub.s32 128, 128
          %128 = vsyncadd %s122, %s127
          %s129 = smul.addr %s15, 2
          %s130 = smul.addr %s129, 64
          %s131 = scalar_lea.hbm %s0, %s130
          %s133 = sshll.u32 %s125, 4
          %s134 = int_to_ptr.vmem [resolvable:$true] %s133
          %136 = dma.hbm_to_vmem [thread:$0]  %s131, 128, %s134, %s122
        $region24: #{tpu_custom_call.1} parent=19 // pred_fallthru
          _
      $region20: #{tpu_custom_call.1} parent=5 // pred_fallthru
        _
      %p137 = scmp.le.s32.totalorder 1, %s15
      %p138 = scmp.lt.s32.totalorder %s15, 3
      %p139 = pnand %p137, %p138
      %p140 = pneg %p139
      // Predicated region
      $region25: #{tpu_custom_call.1} parent=5 // pred_check
        _
      $region26: #{tpu_custom_call.1} parent=5 // pred_check_branch
        %142 = sbr.rel (%p139) target = $region28
      $region27: #{tpu_custom_call.1} parent=5 // pred_region
        %s143 = ssub.s32 %s15, 1
        %s144 = sand.u32 %s28, 1
        %s145 = scalar_lea.sflag [#allocation3], %s144
        %s146 = sand.u32 %s28, 1
        %s147 = smul.addr %s146, 8
        %s148 = scalar_lea.vmem [#allocation2], %s147
        // Predicated region
        $region29: #{tpu_custom_call.1} parent=27 // pred_check
          %p149 = pneg %p41
        $region30: #{tpu_custom_call.1} parent=27 // pred_check_branch
          %151 = sbr.rel (%p149) target = $region32
        $region31: #{tpu_custom_call.1} parent=27 // pred_region
          %152 = dma.done %s145, 128
        $region32: #{tpu_custom_call.1} parent=27 // pred_fallthru
          _
        // Predicated region
        $region33: #{tpu_custom_call.1} parent=27 // pred_check
          %p153 = pneg %p62
        $region34: #{tpu_custom_call.1} parent=27 // pred_check_branch
          %155 = sbr.rel (%p153) target = $region36
        $region35: #{tpu_custom_call.1} parent=27 // pred_region
          %156 = dma.done [#allocation6], 128
        $region36: #{tpu_custom_call.1} parent=27 // pred_fallthru
          _
        %s157 = sand.u32 %s28, 1
        %s158 = scalar_lea.sflag [#allocation3], %s157
        %s159 = sand.u32 %s28, 1
        %s160 = smul.addr %s159, 8
        %s161 = scalar_lea.vmem [#allocation2], %s160
        %p162 = pneg %p41
        %p163 = pneg %p38
        %p164 = pneg %p62
        %p165 = pneg %p59
        %p166 = pneg %p88
        %p167 = pneg %p85
        %s168 = sand.u32 %s75, 1
        %s169 = scalar_lea.sflag [#allocation4], %s168
        %s170 = sand.u32 %s75, 1
        %s171 = smul.addr %s170, 16
        %s172 = scalar_lea.vmem [#allocation7], %s171
        %v173 = vlaneseq
        %v174 = vand.u32 %v173, 127
        %v175 = vadd.s32 %v174, 128
        %vm176 = vcmp.lt.s32.totalorder %v174, 0
        %v177 = vsub.s32 0, %v174
        %v178 = vsel %vm176, %v177, %v174
        %v179 = vshrl.u32 %v178, 4
        %v180 = vand.u32 %v178, 15
        %v181 = vsub.s32 0, %v180
        %v182 = vsel %vm176, %v181, %v180
        %vm183 = vcmp.lt.s32.totalorder %v175, 0
        %v184 = vsub.s32 0, %v175
        %v185 = vsel %vm183, %v184, %v175
        %v186 = vshrl.u32 %v185, 4
        %v187 = vand.u32 %v185, 15
        %v188 = vsub.s32 0, %v187
        %v189 = vsel %vm183, %v188, %v187
        %vm190 = vcmp.ne.s32.totalorder %v182, 0
        %vm191 = vcmp.ne.s32.totalorder %v189, 0
        %vm192 = vcmp.lt.s32.totalorder %v182, 0
        %vm193 = vcmp.lt.s32.totalorder %v189, 0
        %vm194 = vmand %vm192, %vm190
        %vm195 = vmand %vm193, %vm191
        %v196 = vadd.s32 %v182, 16
        %v197 = vadd.s32 %v189, 16
        %v198 = vsel %vm194, %v196, %v182
        %v199 = vsel %vm195, %v197, %v189
        %vm200 = vcmp.ge.s32.totalorder %v198, 1
        %vm201 = vcmp.ge.s32.totalorder %v199, 1
        %vm202 = vcmp.ge.s32.totalorder %v174, 16
        %vm203 = vcmp.ge.s32.totalorder %v175, 16
        %vm204 = vmand %vm200, %vm202
        %vm205 = vmand %vm201, %vm203
        %vm206 = vcmp.le.s32.totalorder %v198, 14
        %vm207 = vcmp.le.s32.totalorder %v199, 14
        %vm208 = vmand %vm206, %vm202
        %vm209 = vmand %vm207, %vm203
        %vm210 = vcmp.lt.s32.totalorder %v174, 240
        %vm211 = vcmp.lt.s32.totalorder %v175, 240
        %vm212 = vmand %vm200, %vm210
        %vm213 = vmand %vm201, %vm211
        %vm214 = vmand %vm206, %vm210
        %vm215 = vmand %vm207, %vm211
        %v216 = vld [vmem:[#allocation5] sm:$0xff]
        %v217 = vld [vmem:[%s148] sm:$0xff]
        %v219 = vcombine.high %v217, %v217
        %221 = vrot.lane.b32.xlu0 %v217, 17
        %v222 = vpop.permute.xlu0 %221
        %223 = vrot.lane.b32.xlu0 %v219, 17
        %v224 = vpop.permute.xlu0 %223
        %vm225 = vcmp.lt.s32.totalorder %v174, 17
        %v226 = vsel %vm225, %v222, %v224
        %v227 = vsel %vm225, %v224, %v222
        %v228 = vsel %vm204, 1, 0
        %v229 = vsel %vm205, 1, 0
        %vm230 = vcmp.eq.s32.totalorder %v228, 1
        %vm231 = vcmp.eq.s32.totalorder %v229, 1
        %v232 = vsel %vm230, %v227, 0.0
        %v233 = vsel %vm231, %v226, 0.0
        %234 = vrot.lane.b32.xlu0 %v217, 16
        %v235 = vpop.permute.xlu0 %234
        %236 = vrot.lane.b32.xlu0 %v219, 16
        %v237 = vpop.permute.xlu0 %236
        %vm238 = vcmp.lt.s32.totalorder %v174, 16
        %v239 = vsel %vm238, %v235, %v237
        %v240 = vsel %vm238, %v237, %v235
        %v241 = vsel %vm202, 1, 0
        %v242 = vsel %vm203, 1, 0
        %vm243 = vcmp.eq.s32.totalorder %v241, 1
        %vm244 = vcmp.eq.s32.totalorder %v242, 1
        %v245 = vsel %vm243, %v240, 0.0
        %v246 = vsel %vm244, %v239, 0.0
        %247 = vrot.lane.b32.xlu0 %v217, 15
        %v248 = vpop.permute.xlu0 %247
        %249 = vrot.lane.b32.xlu0 %v219, 15
        %v250 = vpop.permute.xlu0 %249
        %vm251 = vcmp.lt.s32.totalorder %v174, 15
        %v252 = vsel %vm251, %v248, %v250
        %v253 = vsel %vm251, %v250, %v248
        %v254 = vsel %vm208, 1, 0
        %v255 = vsel %vm209, 1, 0
        %vm256 = vcmp.eq.s32.totalorder %v254, 1
        %vm257 = vcmp.eq.s32.totalorder %v255, 1
        %v258 = vsel %vm256, %v253, 0.0
        %v259 = vsel %vm257, %v252, 0.0
        %260 = vrot.lane.b32.xlu0 %v217, 1
        %v261 = vpop.permute.xlu0 %260
        %262 = vrot.lane.b32.xlu0 %v219, 1
        %v263 = vpop.permute.xlu0 %262
        %vm264 = vcmp.lt.s32.totalorder %v174, 1
        %v265 = vsel %vm264, %v261, %v263
        %v266 = vsel %vm264, %v263, %v261
        %v267 = vsel %vm200, 1, 0
        %v268 = vsel %vm201, 1, 0
        %vm269 = vcmp.eq.s32.totalorder %v267, 1
        %vm270 = vcmp.eq.s32.totalorder %v268, 1
        %v271 = vsel %vm269, %v266, 0.0
        %v272 = vsel %vm270, %v265, 0.0
        %273 = vrot.lane.b32.xlu0 %v217, 127
        %v274 = vpop.permute.xlu0 %273
        %275 = vrot.lane.b32.xlu0 %v219, 127
        %v276 = vpop.permute.xlu0 %275
        %vm277 = vcmp.lt.s32.totalorder %v174, 127
        %v278 = vsel %vm277, %v274, %v276
        %v279 = vsel %vm277, %v276, %v274
        %v280 = vsel %vm206, 1, 0
        %v281 = vsel %vm207, 1, 0
        %vm282 = vcmp.eq.s32.totalorder %v280, 1
        %vm283 = vcmp.eq.s32.totalorder %v281, 1
        %v284 = vsel %vm282, %v278, 0.0
        %v285 = vsel %vm283, %v279, 0.0
        %286 = vrot.lane.b32.xlu0 %v217, 113
        %v287 = vpop.permute.xlu0 %286
        %288 = vrot.lane.b32.xlu0 %v219, 113
        %v289 = vpop.permute.xlu0 %288
        %vm290 = vcmp.lt.s32.totalorder %v174, 113
        %v291 = vsel %vm290, %v287, %v289
        %v292 = vsel %vm290, %v289, %v287
        %v293 = vsel %vm212, 1, 0
        %v294 = vsel %vm213, 1, 0
        %vm295 = vcmp.eq.s32.totalorder %v293, 1
        %vm296 = vcmp.eq.s32.totalorder %v294, 1
        %v297 = vsel %vm295, %v291, 0.0
        %v298 = vsel %vm296, %v292, 0.0
        %299 = vrot.lane.b32.xlu0 %v217, 112
        %v300 = vpop.permute.xlu0 %299
        %301 = vrot.lane.b32.xlu0 %v219, 112
        %v302 = vpop.permute.xlu0 %301
        %vm303 = vcmp.lt.s32.totalorder %v174, 112
        %v304 = vsel %vm303, %v300, %v302
        %v305 = vsel %vm303, %v302, %v300
        %v306 = vsel %vm210, 1, 0
        %v307 = vsel %vm211, 1, 0
        %vm308 = vcmp.eq.s32.totalorder %v306, 1
        %vm309 = vcmp.eq.s32.totalorder %v307, 1
        %v310 = vsel %vm308, %v304, 0.0
        %v311 = vsel %vm309, %v305, 0.0
        %312 = vrot.lane.b32.xlu0 %v217, 111
        %v313 = vpop.permute.xlu0 %312
        %314 = vrot.lane.b32.xlu0 %v219, 111
        %v315 = vpop.permute.xlu0 %314
        %vm316 = vcmp.lt.s32.totalorder %v174, 111
        %v317 = vsel %vm316, %v313, %v315
        %v318 = vsel %vm316, %v315, %v313
        %v319 = vsel %vm214, 1, 0
        %v320 = vsel %vm215, 1, 0
        %vm321 = vcmp.eq.s32.totalorder %v319, 1
        %vm322 = vcmp.eq.s32.totalorder %v320, 1
        %v323 = vsel %vm321, %v317, 0.0
        %v324 = vsel %vm322, %v318, 0.0
        %v327 = vrot.slane %v245, 4
        %v328 = vrot.slane %v246, 4
        %v333 = vrot.slane %v271, 4
        %v334 = vrot.slane %v272, 4
        %v339 = vrot.slane %v284, 4
        %v340 = vrot.slane %v285, 4
        %v345 = vrot.slane %v310, 4
        %v346 = vrot.slane %v311, 4
        %vm349 = vcmask 1043456
        %v350 = vsel %vm349, %v232, %v327
        %v351 = vsel %vm349, %v233, %v328
        %v352 = vsel %vm349, %v258, %v333
        %v353 = vsel %vm349, %v259, %v334
        %v354 = vsel %vm349, %v217, %v339
        %v355 = vsel %vm349, %v219, %v340
        %v356 = vsel %vm349, %v297, %v345
        %v357 = vsel %vm349, %v298, %v346
        %v358 = vsel %vm349, %v323, 1.0
        %v359 = vsel %vm349, %v324, 1.0
        %vm360 = vcmask 302080
        %v362 = vsel %vm360, %v216, 0
        %vm364 = vcmask 1044480
        %v366 = vsel %vm364, %v358, 0
        %v369 = vsel %vm364, %v359, 0
        %371 = vmatprep.subr.mxu0 %v351
        %372 = vmatpush1.msra.mxu0 %v350
        %373 = vmatprep.subr.mxu0 %v353
        %374 = vmatpush1.msra.mxu0 %v352
        %375 = vmatprep.subr.mxu0 %v355
        %376 = vmatpush1.msra.mxu0 %v354
        %377 = vmatprep.subr.mxu0 %v357
        %378 = vmatpush1.msra.mxu0 %v356
        %379 = vmatprep.subr.mxu0 %v369
        %380 = vmatpush1.msra.mxu0 %v366
        %381 = vmatprep.subr.mxu0 0.0
        %382 = vmatpush1.msra.mxu0 0.0
        %383 = vmatprep.subr.mxu0 0.0
        %384 = vmatpush1.msra.mxu0 0.0
        %385 = vmatprep.subr.mxu0 0.0
        %386 = vmatpush1.msra.mxu0 0.0
        %387 = vmatprep.subr.mxu0 0.0
        %388 = vmatpush1.msra.mxu0 0.0
        %389 = vmatprep.subr.mxu0 0.0
        %390 = vmatpush1.msra.mxu0 0.0
        %391 = vmatprep.subr.mxu0 0.0
        %392 = vmatpush1.msra.mxu0 0.0
        %393 = vmatprep.subr.mxu0 0.0
        %394 = vmatpush1.msra.mxu0 0.0
        %395 = vmatprep.subr.mxu0 0.0
        %396 = vmatpush1.msra.mxu0 0.0
        %397 = vmatprep.subr.mxu0 0.0
        %398 = vmatpush1.msra.mxu0 0.0
        %399 = vmatprep.subr.mxu0 0.0
        %400 = vmatpush1.msra.mxu0 0.0
        %401 = vmatprep.subr.mxu0 0.0
        %402 = vmatpush1.msra.mxu0 0.0
        %403 = vmatprep.subr.mxu0 0.0
        %404 = vmatpush1.msra.mxu0 0.0
        %405 = vmatprep.subr.mxu0 0.0
        %406 = vmatpush1.msra.mxu0 0.0
        %407 = vmatprep.subr.mxu0 0.0
        %408 = vmatpush1.msra.mxu0 0.0
        %409 = vmatprep.subr.mxu0 0.0
        %410 = vmatpush1.msra.mxu0 0.0
        %411 = vmatprep.subr.mxu0 0.0
        %412 = vmatpush1.msra.mxu0 0.0
        %413 = vmatprep.subr.mxu0 0.0
        %414 = vmatpush1.msra.mxu0 0.0
        %415 = vmatprep.subr.mxu0 0.0
        %416 = vmatpush1.msra.mxu0 0.0
        %417 = vmatprep.subr.mxu0 0.0
        %418 = vmatpush1.msra.mxu0 0.0
        %419 = vmatprep.subr.mxu0 0.0
        %420 = vmatpush1.msra.mxu0 0.0
        %421 = vmatprep.subr.mxu0 0.0
        %422 = vmatpush1.msra.mxu0 0.0
        %423 = vmatprep.subr.mxu0 0.0
        %424 = vmatpush1.msra.mxu0 0.0
        %425 = vmatprep.subr.mxu0 0.0
        %426 = vmatpush1.msra.mxu0 0.0
        %427 = vmatprep.subr.mxu0 0.0
        %428 = vmatpush1.msra.mxu0 0.0
        %429 = vmatprep.subr.mxu0 0.0
        %430 = vmatpush1.msra.mxu0 0.0
        %431 = vmatprep.subr.mxu0 0.0
        %432 = vmatpush1.msra.mxu0 0.0
        %433 = vmatprep.subr.mxu0 0.0
        %434 = vmatpush1.msra.mxu0 0.0
        %435 = vmatprep.mubr.f32.mxu0 0.0
        %436 = vmatmul.mubr.f32.gmra.mrb[0].mxu0 %v362
        %v437 = vpop.f32.mrb[0].mxu0
        %v438 = vadd.f32 0.0, %v437
        %v439 = vpop.f32.mrb[0].mxu0
        %v440 = vadd.f32 0.0, %v439
        %441 = vdwg.mxu0
        %v442 = vmax.f32 %v438, 0.0
        %v443 = vmax.f32 %v440, 0.0
        %444 = vst [vmem:[%s172] sm:$0xff] %v442
        %445 = vst [vmem:[%s172 + $0x8] sm:$0xff] %v443
        %s446 = sand.u32 %s75, 1
        %s447 = scalar_lea.sflag [#allocation4], %s446
        %s448 = sand.u32 %s75, 1
        %s449 = smul.addr %s448, 16
        %s450 = scalar_lea.vmem [#allocation7], %s449
        // Predicated region
        $region37: #{tpu_custom_call.1} parent=27 // pred_check
          %p451 = pneg %p85
        $region38: #{tpu_custom_call.1} parent=27 // pred_check_branch
          %453 = sbr.rel (%p451) target = $region40
        $region39: #{tpu_custom_call.1} parent=27 // pred_region
          %s455 = ssub.s32 256, 256
          %456 = vsyncadd %s447, %s455
          %s457 = smul.addr %s20, 2
          %s458 = smul.addr %s457, 128
          %s459 = scalar_lea.hbm %s2, %s458
          %s461 = sshll.u32 %s450, 4
          %s462 = int_to_ptr.vmem [resolvable:$true] %s461
          %464 = dma.vmem_to_hbm [thread:$0]  %s462, 256, %s459, %s447
        $region40: #{tpu_custom_call.1} parent=27 // pred_fallthru
          _
      $region28: #{tpu_custom_call.1} parent=5 // pred_fallthru
        _
      %p465 = scmp.le.s32.totalorder 2, %s15
      // Predicated region
      $region41: #{tpu_custom_call.1} parent=5 // pred_check
        %p466 = pneg %p465
      $region42: #{tpu_custom_call.1} parent=5 // pred_check_branch
        %468 = sbr.rel (%p466) target = $region44
      $region43: #{tpu_custom_call.1} parent=5 // pred_region
        %s469 = ssub.s32 %s15, 2
        // Predicated region
        $region45: #{tpu_custom_call.1} parent=43 // pred_check
          %p470 = pneg %p91
        $region46: #{tpu_custom_call.1} parent=43 // pred_check_branch
          %472 = sbr.rel (%p470) target = $region48
        $region47: #{tpu_custom_call.1} parent=43 // pred_region
          %s473 = sand.u32 %s76, 1
          %s474 = scalar_lea.sflag [#allocation4], %s473
          %s475 = sand.u32 %s76, 1
          %s476 = smul.addr %s475, 16
          %s477 = scalar_lea.vmem [#allocation7], %s476
          %478 = dma.done %s474, 256
        $region48: #{tpu_custom_call.1} parent=43 // pred_fallthru
          _
      $region44: #{tpu_custom_call.1} parent=5 // pred_fallthru
        _
    $region6: #{tpu_custom_call.1} parent=1 // loop_footer
      %s19 = sadd.s32 1, %s15
    $region7: #{tpu_custom_call.1} parent=1 // loop_footer_branch
      %14 = sbr.rel target = $region3
    $region8: #{tpu_custom_call.1} parent=1 // loop_exit
      _
    %479 = vsyncpa [#allocation3], 1
    %s480 = scalar_lea.sflag [#allocation3], 1
    %481 = vsyncpa %s480, 1
    %482 = vsyncpa [#allocation6], 1
    %483 = vsyncpa [#allocation4], 1
    %s484 = scalar_lea.sflag [#allocation4], 1
    %485 = vsyncpa %s484, 1

</llo_original>
